<compile_context>
chip_gen: v5e
topology: v5e:2x2
jax: 0.10.0
libtpu: 0.0.40
codegen_flags: <defaults>
</compile_context>

<pallas_src>
import functools

import jax
import jax.numpy as jnp
from jax import lax
from jax.experimental import pallas as pl
from jax.experimental.pallas import tpu as pltpu


_HIDDEN = (64, 40, 20, 14)
_BLOCK_B_CAP = 2048          # rows per grid step (multiple of 128 => lane-dense tiles)


def _mlp_kernel(use_bf16,
                x_ref,
                w1_ref, b1_ref,
                w2_ref, b2_ref,
                w3_ref, b3_ref,
                w4_ref, b4_ref,
                w5_ref, b5_ref,
                o_ref):
    # x_ref: (block_b, F) straight from HBM (no host transpose).
    # wK: (outK, inK); bK: (outK, 1); o_ref: (n_out, block_b).
    if use_bf16:
        cast = lambda a: a.astype(jnp.bfloat16)   # bf16 operands, f32 accumulate
    else:
        cast = lambda a: a                        # exact f32 path (default)

    x = cast(x_ref[...])
    # Layer 1: contract feature axis of both operands -> (64, block_b),
    # i.e. batch lands on lanes and stays there for the whole pipeline.
    h = lax.dot_general(cast(w1_ref[...]), x,
                        dimension_numbers=(((1,), (1,)), ((), ())),
                        preferred_element_type=jnp.float32)
    h = jnp.tanh(h + b1_ref[...])
    h = jnp.tanh(jnp.dot(cast(w2_ref[...]), cast(h),
                         preferred_element_type=jnp.float32) + b2_ref[...])
    h = jnp.tanh(jnp.dot(cast(w3_ref[...]), cast(h),
                         preferred_element_type=jnp.float32) + b3_ref[...])
    h = jnp.tanh(jnp.dot(cast(w4_ref[...]), cast(h),
                         preferred_element_type=jnp.float32) + b4_ref[...])
    out = jnp.dot(cast(w5_ref[...]), cast(h),
                  preferred_element_type=jnp.float32) + b5_ref[...]
    o_ref[...] = out.astype(o_ref.dtype)


def _cdiv(a, b):
    return -(-a // b)


def _round_up(x, m):
    return _cdiv(x, m) * m


def _choose_block_b(B):
    """Batch-tile size: full extent for small B, else a 128-multiple tile with
    >=2 grid steps (v7x dual-TensorCore) capped at _BLOCK_B_CAP."""
    if B < 256:
        return B                                   # single full-extent block
    Bp = _round_up(B, 128)
    n_steps = max(2, _cdiv(Bp, _BLOCK_B_CAP))
    return min(_round_up(_cdiv(Bp, n_steps), 128), _BLOCK_B_CAP)


@functools.partial(jax.jit, static_argnames=("block_b", "use_bf16"))
def _mlp_forward_impl(x, params, *, block_b, use_bf16):
    B, F = x.shape
    n_output = params["w5"].shape[0]
    grid = (_cdiv(B, block_b),)

    def full_spec(arr):
        # Whole (tiny) array as one VMEM-resident block every grid step.
        return pl.BlockSpec(arr.shape, lambda i: (0, 0))

    # Advisory cost estimate so XLA schedules surrounding HBM traffic well.
    flops = 2 * B * (F * 64 + 64 * 40 + 40 * 20 + 20 * 14 + 14 * n_output)
    transcendentals = B * sum(_HIDDEN)
    w_bytes = sum(int(params[k].size) * 4 for k in params)
    bytes_accessed = 4 * B * (F + n_output) + w_bytes

    out_t = pl.pallas_call(
        functools.partial(_mlp_kernel, use_bf16),
        out_shape=jax.ShapeDtypeStruct((n_output, B), jnp.float32),
        grid=grid,
        in_specs=[
            pl.BlockSpec((block_b, F), lambda i: (i, 0)),   # contiguous x tile
            full_spec(params["w1"]), full_spec(params["b1"]),
            full_spec(params["w2"]), full_spec(params["b2"]),
            full_spec(params["w3"]), full_spec(params["b3"]),
            full_spec(params["w4"]), full_spec(params["b4"]),
            full_spec(params["w5"]), full_spec(params["b5"]),
        ],
        out_specs=pl.BlockSpec((n_output, block_b), lambda i: (0, i)),
        compiler_params=pltpu.CompilerParams(
            dimension_semantics=("parallel",)),
        cost_estimate=pl.CostEstimate(
            flops=flops,
            transcendentals=transcendentals,
            bytes_accessed=bytes_accessed),
    )(x,
      params["w1"], params["b1"],
      params["w2"], params["b2"],
      params["w3"], params["b3"],
      params["w4"], params["b4"],
      params["w5"], params["b5"])

    # Kernel output is lane-dense (n_output, B); transpose back to PyTorch's
    # (B, n_output).  (Cheap: 8 B/row.)
    return out_t.T


def mlp_forward(x, params, *, use_bf16=False):
    """x: (B, n_feature) f32.  params: PyTorch-layout weights (out,in) / biases (out,1)."""
    B = x.shape[0]
    block_b = _choose_block_b(B)
    return _mlp_forward_impl(x, params, block_b=block_b, use_bf16=use_bf16)


def init_params(key, n_feature, n_output):
    """Mimics PyTorch Linear default init (uniform +-1/sqrt(in_dim)).

    Weights kept in PyTorch layout: (out_dim, in_dim); biases: (out_dim, 1)."""
    dims = [n_feature, 64, 40, 20, 14, n_output]
    params = {}
    for idx in range(5):
        in_d, out_d = dims[idx], dims[idx + 1]
        key, kw, kb = jax.random.split(key, 3)
        bound = 1.0 / jnp.sqrt(float(in_d))
        params[f"w{idx + 1}"] = jax.random.uniform(
            kw, (out_d, in_d), jnp.float32, minval=-bound, maxval=bound)
        params[f"b{idx + 1}"] = jax.random.uniform(
            kb, (out_d, 1), jnp.float32, minval=-bound, maxval=bound)
    return params


def reference_forward(x, params):
    h = jnp.tanh(x @ params["w1"].T + params["b1"].T)
    h = jnp.tanh(h @ params["w2"].T + params["b2"].T)
    h = jnp.tanh(h @ params["w3"].T + params["b3"].T)
    h = jnp.tanh(h @ params["w4"].T + params["b4"].T)
    return h @ params["w5"].T + params["b5"].T


if __name__ == "__main__":
    n_feature, n_output = 16, 2

    key = jax.random.PRNGKey(0)
    key, kx1, kx2 = jax.random.split(key, 3)
    params = init_params(key, n_feature, n_output)

    # Small batch: single full-extent block, no masking.
    x_small = jax.random.normal(kx1, (8, n_feature), jnp.float32)
    out_small = jax.block_until_ready(mlp_forward(x_small, params))
    ref_small = reference_forward(x_small, params)
    assert out_small.shape == (8, n_output)
    assert jnp.allclose(out_small, ref_small, atol=1e-5, rtol=1e-5), \
        "small-batch mismatch vs reference"

    # Non-tile-aligned batch: exercises the multi-step grid + masked tail tile.
    x_big = jax.random.normal(kx2, (300, n_feature), jnp.float32)
    out_big = jax.block_until_ready(mlp_forward(x_big, params))
    ref_big = reference_forward(x_big, params)
    assert out_big.shape == (300, n_output)
    assert jnp.allclose(out_big, ref_big, atol=1e-5, rtol=1e-5), \
        "tiled-batch mismatch vs reference"

    print("KERNEL_OK")
</pallas_src>

<mosaic_0001>
module attributes {stable_mosaic.version = 11 : i64} {
  func.func @_mlp_kernel(%arg0: i32, %arg1: memref<8x16xf32, #tpu.memory_space<vmem>>, %arg2: memref<64x16xf32, #tpu.memory_space<vmem>>, %arg3: memref<64x1xf32, #tpu.memory_space<vmem>>, %arg4: memref<40x64xf32, #tpu.memory_space<vmem>>, %arg5: memref<40x1xf32, #tpu.memory_space<vmem>>, %arg6: memref<20x40xf32, #tpu.memory_space<vmem>>, %arg7: memref<20x1xf32, #tpu.memory_space<vmem>>, %arg8: memref<14x20xf32, #tpu.memory_space<vmem>>, %arg9: memref<14x1xf32, #tpu.memory_space<vmem>>, %arg10: memref<2x14xf32, #tpu.memory_space<vmem>>, %arg11: memref<2x1xf32, #tpu.memory_space<vmem>>, %arg12: memref<2x8xf32, #tpu.memory_space<vmem>>) attributes {dimension_semantics = [#tpu.dimension_semantics<parallel>], iteration_bounds = array<i64: 1>, scalar_prefetch = 0 : i64, scratch_operands = 0 : i64, tpu.core_type = #tpu.core_type<tc>, window_params = [{transform_indices = @transform_0, window_bounds = array<i64: 8, 16>}, {pipeline_mode = #tpu.pipeline_mode<synchronous>, transform_indices = @transform_1, window_bounds = array<i64: 64, 16>}, {pipeline_mode = #tpu.pipeline_mode<synchronous>, transform_indices = @transform_2, window_bounds = array<i64: 64, 1>}, {pipeline_mode = #tpu.pipeline_mode<synchronous>, transform_indices = @transform_3, window_bounds = array<i64: 40, 64>}, {pipeline_mode = #tpu.pipeline_mode<synchronous>, transform_indices = @transform_4, window_bounds = array<i64: 40, 1>}, {pipeline_mode = #tpu.pipeline_mode<synchronous>, transform_indices = @transform_5, window_bounds = array<i64: 20, 40>}, {pipeline_mode = #tpu.pipeline_mode<synchronous>, transform_indices = @transform_6, window_bounds = array<i64: 20, 1>}, {pipeline_mode = #tpu.pipeline_mode<synchronous>, transform_indices = @transform_7, window_bounds = array<i64: 14, 20>}, {pipeline_mode = #tpu.pipeline_mode<synchronous>, transform_indices = @transform_8, window_bounds = array<i64: 14, 1>}, {pipeline_mode = #tpu.pipeline_mode<synchronous>, transform_indices = @transform_9, window_bounds = array<i64: 2, 14>}, {pipeline_mode = #tpu.pipeline_mode<synchronous>, transform_indices = @transform_10, window_bounds = array<i64: 2, 1>}, {transform_indices = @transform_11, window_bounds = array<i64: 2, 8>}]} {
    %c0 = arith.constant 0 : index
    %c0_0 = arith.constant 0 : index
    %0 = vector.load %arg1[%c0, %c0_0] : memref<8x16xf32, #tpu.memory_space<vmem>>, vector<8x16xf32>
    %c0_1 = arith.constant 0 : index
    %c0_2 = arith.constant 0 : index
    %1 = vector.load %arg2[%c0_1, %c0_2] : memref<64x16xf32, #tpu.memory_space<vmem>>, vector<64x16xf32>
    %cst = arith.constant dense<0.000000e+00> : vector<64x8xf32>
    %2 = tpu.matmul %1, %0, %cst {dimension_numbers = #tpu.dot_dimension_numbers<[1], [1], [0], [0], [0, 0, 1, 0], [], []>} : vector<64x16xf32>, vector<8x16xf32>, vector<64x8xf32> -> vector<64x8xf32>
    %c0_3 = arith.constant 0 : index
    %c0_4 = arith.constant 0 : index
    %3 = vector.load %arg3[%c0_3, %c0_4] : memref<64x1xf32, #tpu.memory_space<vmem>>, vector<64x1xf32>
    %4 = vector.broadcast %3 : vector<64x1xf32> to vector<64x8xf32>
    %5 = arith.addf %2, %4 : vector<64x8xf32>
    %6 = math.tanh %5 : vector<64x8xf32>
    %c0_5 = arith.constant 0 : index
    %c0_6 = arith.constant 0 : index
    %7 = vector.load %arg4[%c0_5, %c0_6] : memref<40x64xf32, #tpu.memory_space<vmem>>, vector<40x64xf32>
    %cst_7 = arith.constant dense<0.000000e+00> : vector<40x8xf32>
    %8 = tpu.matmul %7, %6, %cst_7 {dimension_numbers = #tpu.dot_dimension_numbers<[1], [0], [0], [1], [0, 0, 1, 1], [], []>} : vector<40x64xf32>, vector<64x8xf32>, vector<40x8xf32> -> vector<40x8xf32>
    %c0_8 = arith.constant 0 : index
    %c0_9 = arith.constant 0 : index
    %9 = vector.load %arg5[%c0_8, %c0_9] : memref<40x1xf32, #tpu.memory_space<vmem>>, vector<40x1xf32>
    %10 = vector.broadcast %9 : vector<40x1xf32> to vector<40x8xf32>
    %11 = arith.addf %8, %10 : vector<40x8xf32>
    %12 = math.tanh %11 : vector<40x8xf32>
    %c0_10 = arith.constant 0 : index
    %c0_11 = arith.constant 0 : index
    %13 = vector.load %arg6[%c0_10, %c0_11] : memref<20x40xf32, #tpu.memory_space<vmem>>, vector<20x40xf32>
    %cst_12 = arith.constant dense<0.000000e+00> : vector<20x8xf32>
    %14 = tpu.matmul %13, %12, %cst_12 {dimension_numbers = #tpu.dot_dimension_numbers<[1], [0], [0], [1], [0, 0, 1, 1], [], []>} : vector<20x40xf32>, vector<40x8xf32>, vector<20x8xf32> -> vector<20x8xf32>
    %c0_13 = arith.constant 0 : index
    %c0_14 = arith.constant 0 : index
    %15 = vector.load %arg7[%c0_13, %c0_14] : memref<20x1xf32, #tpu.memory_space<vmem>>, vector<20x1xf32>
    %16 = vector.broadcast %15 : vector<20x1xf32> to vector<20x8xf32>
    %17 = arith.addf %14, %16 : vector<20x8xf32>
    %18 = math.tanh %17 : vector<20x8xf32>
    %c0_15 = arith.constant 0 : index
    %c0_16 = arith.constant 0 : index
    %19 = vector.load %arg8[%c0_15, %c0_16] : memref<14x20xf32, #tpu.memory_space<vmem>>, vector<14x20xf32>
    %cst_17 = arith.constant dense<0.000000e+00> : vector<14x8xf32>
    %20 = tpu.matmul %19, %18, %cst_17 {dimension_numbers = #tpu.dot_dimension_numbers<[1], [0], [0], [1], [0, 0, 1, 1], [], []>} : vector<14x20xf32>, vector<20x8xf32>, vector<14x8xf32> -> vector<14x8xf32>
    %c0_18 = arith.constant 0 : index
    %c0_19 = arith.constant 0 : index
    %21 = vector.load %arg9[%c0_18, %c0_19] : memref<14x1xf32, #tpu.memory_space<vmem>>, vector<14x1xf32>
    %22 = vector.broadcast %21 : vector<14x1xf32> to vector<14x8xf32>
    %23 = arith.addf %20, %22 : vector<14x8xf32>
    %24 = math.tanh %23 : vector<14x8xf32>
    %c0_20 = arith.constant 0 : index
    %c0_21 = arith.constant 0 : index
    %25 = vector.load %arg10[%c0_20, %c0_21] : memref<2x14xf32, #tpu.memory_space<vmem>>, vector<2x14xf32>
    %cst_22 = arith.constant dense<0.000000e+00> : vector<2x8xf32>
    %26 = tpu.matmul %25, %24, %cst_22 {dimension_numbers = #tpu.dot_dimension_numbers<[1], [0], [0], [1], [0, 0, 1, 1], [], []>} : vector<2x14xf32>, vector<14x8xf32>, vector<2x8xf32> -> vector<2x8xf32>
    %c0_23 = arith.constant 0 : index
    %c0_24 = arith.constant 0 : index
    %27 = vector.load %arg11[%c0_23, %c0_24] : memref<2x1xf32, #tpu.memory_space<vmem>>, vector<2x1xf32>
    %28 = vector.broadcast %27 : vector<2x1xf32> to vector<2x8xf32>
    %29 = arith.addf %26, %28 : vector<2x8xf32>
    %c0_25 = arith.constant 0 : index
    %c0_26 = arith.constant 0 : index
    %30 = vector.load %arg12[%c0_25, %c0_26] : memref<2x8xf32, #tpu.memory_space<vmem>>, vector<2x8xf32>
    tpu.vector_store %arg12[%c0_25, %c0_26], %29 {strides = array<i32>} : memref<2x8xf32, #tpu.memory_space<vmem>>, vector<2x8xf32>,
    return
  }
  func.func @transform_0(%arg0: i32) -> (i32, i32) {
    %c0_i32 = arith.constant 0 : i32
    %c0_i32_0 = arith.constant 0 : i32
    return %arg0, %c0_i32 : i32, i32
  }
  func.func @transform_1(%arg0: i32) -> (i32, i32) {
    %c0_i32 = arith.constant 0 : i32
    %c0_i32_0 = arith.constant 0 : i32
    %c0_i32_1 = arith.constant 0 : i32
    return %c0_i32, %c0_i32_0 : i32, i32
  }
  func.func @transform_2(%arg0: i32) -> (i32, i32) {
    %c0_i32 = arith.constant 0 : i32
    %c0_i32_0 = arith.constant 0 : i32
    %c0_i32_1 = arith.constant 0 : i32
    return %c0_i32, %c0_i32_0 : i32, i32
  }
  func.func @transform_3(%arg0: i32) -> (i32, i32) {
    %c0_i32 = arith.constant 0 : i32
    %c0_i32_0 = arith.constant 0 : i32
    %c0_i32_1 = arith.constant 0 : i32
    return %c0_i32, %c0_i32_0 : i32, i32
  }
  func.func @transform_4(%arg0: i32) -> (i32, i32) {
    %c0_i32 = arith.constant 0 : i32
    %c0_i32_0 = arith.constant 0 : i32
    %c0_i32_1 = arith.constant 0 : i32
    return %c0_i32, %c0_i32_0 : i32, i32
  }
  func.func @transform_5(%arg0: i32) -> (i32, i32) {
    %c0_i32 = arith.constant 0 : i32
    %c0_i32_0 = arith.constant 0 : i32
    %c0_i32_1 = arith.constant 0 : i32
    return %c0_i32, %c0_i32_0 : i32, i32
  }
  func.func @transform_6(%arg0: i32) -> (i32, i32) {
    %c0_i32 = arith.constant 0 : i32
    %c0_i32_0 = arith.constant 0 : i32
    %c0_i32_1 = arith.constant 0 : i32
    return %c0_i32, %c0_i32_0 : i32, i32
  }
  func.func @transform_7(%arg0: i32) -> (i32, i32) {
    %c0_i32 = arith.constant 0 : i32
    %c0_i32_0 = arith.constant 0 : i32
    %c0_i32_1 = arith.constant 0 : i32
    return %c0_i32, %c0_i32_0 : i32, i32
  }
  func.func @transform_8(%arg0: i32) -> (i32, i32) {
    %c0_i32 = arith.constant 0 : i32
    %c0_i32_0 = arith.constant 0 : i32
    %c0_i32_1 = arith.constant 0 : i32
    return %c0_i32, %c0_i32_0 : i32, i32
  }
  func.func @transform_9(%arg0: i32) -> (i32, i32) {
    %c0_i32 = arith.constant 0 : i32
    %c0_i32_0 = arith.constant 0 : i32
    %c0_i32_1 = arith.constant 0 : i32
    return %c0_i32, %c0_i32_0 : i32, i32
  }
  func.func @transform_10(%arg0: i32) -> (i32, i32) {
    %c0_i32 = arith.constant 0 : i32
    %c0_i32_0 = arith.constant 0 : i32
    %c0_i32_1 = arith.constant 0 : i32
    return %c0_i32, %c0_i32_0 : i32, i32
  }
  func.func @transform_11(%arg0: i32) -> (i32, i32) {
    %c0_i32 = arith.constant 0 : i32
    %c0_i32_0 = arith.constant 0 : i32
    return %c0_i32, %arg0 : i32, i32
  }
}

</mosaic_0001>

<llo_original>
// kernel: _mlp_forward_impl.1
$region0: #{_mlp_forward_impl.1}
  #allocation0 [shape = 'u32[]', space=smem, size = 0x4, offset = 0x4, fixed_abs, tag = 'smem constant byte address 0x4 - core index']
  #allocation1 [shape = 'u32[72,128]{1,0:T(1,128)}', space=vmem, size = 0x9000, scoped, tag = 'internal scratch']
  %s0 = inlined_call_operand.vmem [shape: f32[8,16], index: 0, kind: input, shape index: {}]
  %s1 = inlined_call_operand.vmem [shape: f32[64,16], index: 1, kind: input, shape index: {}]
  %s2 = inlined_call_operand.vmem [shape: f32[64,1], index: 2, kind: input, shape index: {}]
  %s3 = inlined_call_operand.vmem [shape: f32[40,64], index: 3, kind: input, shape index: {}]
  %s4 = inlined_call_operand.vmem [shape: f32[40,1], index: 4, kind: input, shape index: {}]
  %s5 = inlined_call_operand.vmem [shape: f32[20,40], index: 5, kind: input, shape index: {}]
  %s6 = inlined_call_operand.vmem [shape: f32[20,1], index: 6, kind: input, shape index: {}]
  %s7 = inlined_call_operand.vmem [shape: f32[14,20], index: 7, kind: input, shape index: {}]
  %s8 = inlined_call_operand.vmem [shape: f32[14,1], index: 8, kind: input, shape index: {}]
  %s9 = inlined_call_operand.vmem [shape: f32[2,14], index: 9, kind: input, shape index: {}]
  %s10 = inlined_call_operand.vmem [shape: f32[2,1], index: 10, kind: input, shape index: {}]
  %s11 = inlined_call_operand.hbm [shape: f32[2,8], index: 11, kind: output, shape index: {}]
  %s12 = sld [smem:[#allocation0]]
  $region54: #{_mlp_forward_impl.1} parent=0
    _
  %s14 = ssub.s32 1, %s12
  %s15 = scalar_select 0, %s14, %s12
  $region1: #{_mlp_forward_impl.1} parent=0
    #allocation2 [shape = 'u8[1024]{0}', space=vmem, size = 0x400, scoped, tag = 'output window, operand 0, single buffered']
    #allocation3 [shape = 's32[1]{0}', space=sflag, size = 0x4, scoped, tag = 'scoped memory for _mlp_forward_impl.1']
    %16 = vsyncpa [#allocation3], 0
    // Predicated region
    $region2: #{_mlp_forward_impl.1} parent=1 // pred_check
      _
    $region3: #{_mlp_forward_impl.1} parent=1 // pred_check_branch
      %18 = sbr.rel (0) target = $region5
    $region4: #{_mlp_forward_impl.1} parent=1 // pred_region
      _
    $region5: #{_mlp_forward_impl.1} parent=1 // pred_fallthru
      _
    // Predicated region
    $region6: #{_mlp_forward_impl.1} parent=1 // pred_check
      _
    $region7: #{_mlp_forward_impl.1} parent=1 // pred_check_branch
      %20 = sbr.rel (0) target = $region9
    $region8: #{_mlp_forward_impl.1} parent=1 // pred_region
      _
    $region9: #{_mlp_forward_impl.1} parent=1 // pred_fallthru
      _
    // Predicated region
    $region10: #{_mlp_forward_impl.1} parent=1 // pred_check
      _
    $region11: #{_mlp_forward_impl.1} parent=1 // pred_check_branch
      %22 = sbr.rel (0) target = $region13
    $region12: #{_mlp_forward_impl.1} parent=1 // pred_region
      _
    $region13: #{_mlp_forward_impl.1} parent=1 // pred_fallthru
      _
    // Predicated region
    $region14: #{_mlp_forward_impl.1} parent=1 // pred_check
      _
    $region15: #{_mlp_forward_impl.1} parent=1 // pred_check_branch
      %24 = sbr.rel (0) target = $region17
    $region16: #{_mlp_forward_impl.1} parent=1 // pred_region
      _
    $region17: #{_mlp_forward_impl.1} parent=1 // pred_fallthru
      _
    // Predicated region
    $region18: #{_mlp_forward_impl.1} parent=1 // pred_check
      _
    $region19: #{_mlp_forward_impl.1} parent=1 // pred_check_branch
      %26 = sbr.rel (0) target = $region21
    $region20: #{_mlp_forward_impl.1} parent=1 // pred_region
      _
    $region21: #{_mlp_forward_impl.1} parent=1 // pred_fallthru
      _
    // Predicated region
    $region22: #{_mlp_forward_impl.1} parent=1 // pred_check
      _
    $region23: #{_mlp_forward_impl.1} parent=1 // pred_check_branch
      %28 = sbr.rel (0) target = $region25
    $region24: #{_mlp_forward_impl.1} parent=1 // pred_region
      _
    $region25: #{_mlp_forward_impl.1} parent=1 // pred_fallthru
      _
    // Predicated region
    $region26: #{_mlp_forward_impl.1} parent=1 // pred_check
      _
    $region27: #{_mlp_forward_impl.1} parent=1 // pred_check_branch
      %30 = sbr.rel (0) target = $region29
    $region28: #{_mlp_forward_impl.1} parent=1 // pred_region
      _
    $region29: #{_mlp_forward_impl.1} parent=1 // pred_fallthru
      _
    // Predicated region
    $region30: #{_mlp_forward_impl.1} parent=1 // pred_check
      _
    $region31: #{_mlp_forward_impl.1} parent=1 // pred_check_branch
      %32 = sbr.rel (0) target = $region33
    $region32: #{_mlp_forward_impl.1} parent=1 // pred_region
      _
    $region33: #{_mlp_forward_impl.1} parent=1 // pred_fallthru
      _
    // Predicated region
    $region34: #{_mlp_forward_impl.1} parent=1 // pred_check
      _
    $region35: #{_mlp_forward_impl.1} parent=1 // pred_check_branch
      %34 = sbr.rel (0) target = $region37
    $region36: #{_mlp_forward_impl.1} parent=1 // pred_region
      _
    $region37: #{_mlp_forward_impl.1} parent=1 // pred_fallthru
      _
    // Predicated region
    $region38: #{_mlp_forward_impl.1} parent=1 // pred_check
      _
    $region39: #{_mlp_forward_impl.1} parent=1 // pred_check_branch
      %36 = sbr.rel (0) target = $region41
    $region40: #{_mlp_forward_impl.1} parent=1 // pred_region
      _
    $region41: #{_mlp_forward_impl.1} parent=1 // pred_fallthru
      _
    // Predicated region
    $region42: #{_mlp_forward_impl.1} parent=1 // pred_check
      _
    $region43: #{_mlp_forward_impl.1} parent=1 // pred_check_branch
      %38 = sbr.rel (0) target = $region45
    $region44: #{_mlp_forward_impl.1} parent=1 // pred_region
      _
    $region45: #{_mlp_forward_impl.1} parent=1 // pred_fallthru
      _
    %v39 = vld [vmem:[%s0] sm:$0xff]
    %v40 = vld [vmem:[%s1] sm:$0xff]
    %v41 = vld [vmem:[%s1 + $0x8] sm:$0xff]
    %v42 = vld [vmem:[%s1 + $0x10] sm:$0xff]
    %v43 = vld [vmem:[%s1 + $0x18] sm:$0xff]
    %v44 = vld [vmem:[%s1 + $0x20] sm:$0xff]
    %v45 = vld [vmem:[%s1 + $0x28] sm:$0xff]
    %v46 = vld [vmem:[%s1 + $0x30] sm:$0xff]
    %v47 = vld [vmem:[%s1 + $0x38] sm:$0xff]
    %v48 = vld [vmem:[%s2] sm:$0xff]
    %v49 = vld [vmem:[%s2 + $0x8] sm:$0xff]
    %v50 = vld [vmem:[%s2 + $0x10] sm:$0xff]
    %v51 = vld [vmem:[%s2 + $0x18] sm:$0xff]
    %v52 = vld [vmem:[%s2 + $0x20] sm:$0xff]
    %v53 = vld [vmem:[%s2 + $0x28] sm:$0xff]
    %v54 = vld [vmem:[%s2 + $0x30] sm:$0xff]
    %v55 = vld [vmem:[%s2 + $0x38] sm:$0xff]
    %57 = vset.pattern.permute.xlu0 0
    %58 = vperm.xlu0 %57, %v48
    %v59 = vpop.permute.xlu0 %58
    %62 = vset.pattern.permute.xlu0 0
    %63 = vperm.xlu0 %62, %v49
    %v64 = vpop.permute.xlu0 %63
    %67 = vset.pattern.permute.xlu0 0
    %68 = vperm.xlu0 %67, %v50
    %v69 = vpop.permute.xlu0 %68
    %72 = vset.pattern.permute.xlu0 0
    %73 = vperm.xlu0 %72, %v51
    %v74 = vpop.permute.xlu0 %73
    %77 = vset.pattern.permute.xlu0 0
    %78 = vperm.xlu0 %77, %v52
    %v79 = vpop.permute.xlu0 %78
    %82 = vset.pattern.permute.xlu0 0
    %83 = vperm.xlu0 %82, %v53
    %v84 = vpop.permute.xlu0 %83
    %87 = vset.pattern.permute.xlu0 0
    %88 = vperm.xlu0 %87, %v54
    %v89 = vpop.permute.xlu0 %88
    %92 = vset.pattern.permute.xlu0 0
    %93 = vperm.xlu0 %92, %v55
    %v94 = vpop.permute.xlu0 %93
    %vm96 = vcmask 130048
    %v98 = vsel %vm96, %v40, 0
    %v101 = vsel %vm96, %v41, 0
    %v104 = vsel %vm96, %v42, 0
    %v107 = vsel %vm96, %v43, 0
    %v110 = vsel %vm96, %v44, 0
    %v113 = vsel %vm96, %v45, 0
    %v116 = vsel %vm96, %v46, 0
    %v119 = vsel %vm96, %v47, 0
    %v122 = vsel %vm96, %v39, 0
    %124 = vmatpush.xpose.msra.mxu0 0.0
    %125 = vmatpush.xpose.msra.mxu0 0.0
    %126 = vmatpush.xpose.msra.mxu0 0.0
    %127 = vmatpush.xpose.msra.mxu0 0.0
    %128 = vmatpush.xpose.msra.mxu0 0.0
    %129 = vmatpush.xpose.msra.mxu0 0.0
    %130 = vmatpush.xpose.msra.mxu0 0.0
    %131 = vmatpush.xpose.msra.mxu0 0.0
    %132 = vmatpush.xpose.msra.mxu0 0.0
    %133 = vmatpush.xpose.msra.mxu0 0.0
    %134 = vmatpush.xpose.msra.mxu0 0.0
    %135 = vmatpush.xpose.msra.mxu0 0.0
    %136 = vmatpush.xpose.msra.mxu0 0.0
    %137 = vmatpush.xpose.msra.mxu0 0.0
    %138 = vmatpush.xpose.msra.mxu0 0.0
    %139 = vmatpush.xpose.msra.mxu0 %v122
    %140 = vmatmul.f32.gmra.mxu0 %v98
    %v141 = vpop.f32.mrf.mxu0
    %v142 = vadd.f32 %v59, %v141
    %143 = vmatmul.f32.gmra.mxu0 %v101
    %v144 = vpop.f32.mrf.mxu0
    %v145 = vadd.f32 %v64, %v144
    %146 = vmatmul.f32.gmra.mxu0 %v104
    %v147 = vpop.f32.mrf.mxu0
    %v148 = vadd.f32 %v69, %v147
    %149 = vmatmul.f32.gmra.mxu0 %v107
    %v150 = vpop.f32.mrf.mxu0
    %v151 = vadd.f32 %v74, %v150
    %152 = vmatmul.f32.gmra.mxu0 %v110
    %v153 = vpop.f32.mrf.mxu0
    %v154 = vadd.f32 %v79, %v153
    %155 = vmatmul.f32.gmra.mxu0 %v113
    %v156 = vpop.f32.mrf.mxu0
    %v157 = vadd.f32 %v84, %v156
    %158 = vmatmul.f32.gmra.mxu0 %v116
    %v159 = vpop.f32.mrf.mxu0
    %v160 = vadd.f32 %v89, %v159
    %161 = vmatmul.f32.gmra.mxu0 %v119
    %v162 = vpop.f32.mrf.mxu0
    %v163 = vadd.f32 %v94, %v162
    %164 = vdwg.mxu0
    %v165 = vtanh.pop %v142
    %v166 = vtanh.pop %v145
    %v167 = vtanh.pop %v148
    %v168 = vtanh.pop %v151
    %v169 = vtanh.pop %v154
    %v170 = vtanh.pop %v157
    %v171 = vtanh.pop %v160
    %v172 = vtanh.pop %v163
    %v173 = vld [vmem:[%s3] sm:$0xff]
    %v174 = vld [vmem:[%s3 + $0x8] sm:$0xff]
    %v175 = vld [vmem:[%s3 + $0x10] sm:$0xff]
    %v176 = vld [vmem:[%s3 + $0x18] sm:$0xff]
    %v177 = vld [vmem:[%s3 + $0x20] sm:$0xff]
    %v178 = vld [vmem:[%s4] sm:$0xff]
    %v179 = vld [vmem:[%s4 + $0x8] sm:$0xff]
    %v180 = vld [vmem:[%s4 + $0x10] sm:$0xff]
    %v181 = vld [vmem:[%s4 + $0x18] sm:$0xff]
    %v182 = vld [vmem:[%s4 + $0x20] sm:$0xff]
    %184 = vset.pattern.permute.xlu0 0
    %185 = vperm.xlu0 %184, %v178
    %v186 = vpop.permute.xlu0 %185
    %189 = vset.pattern.permute.xlu0 0
    %190 = vperm.xlu0 %189, %v179
    %v191 = vpop.permute.xlu0 %190
    %194 = vset.pattern.permute.xlu0 0
    %195 = vperm.xlu0 %194, %v180
    %v196 = vpop.permute.xlu0 %195
    %199 = vset.pattern.permute.xlu0 0
    %200 = vperm.xlu0 %199, %v181
    %v201 = vpop.permute.xlu0 %200
    %204 = vset.pattern.permute.xlu0 0
    %205 = vperm.xlu0 %204, %v182
    %v206 = vpop.permute.xlu0 %205
    %vm208 = vcmask 523264
    %v210 = vsel %vm208, %v173, 0
    %v213 = vsel %vm208, %v174, 0
    %v216 = vsel %vm208, %v175, 0
    %v219 = vsel %vm208, %v176, 0
    %v222 = vsel %vm208, %v177, 0
    %224 = vmatpush.msra.mxu0 0.0
    %225 = vmatpush.msra.mxu0 0.0
    %226 = vmatpush.msra.mxu0 0.0
    %227 = vmatpush.msra.mxu0 0.0
    %228 = vmatpush.msra.mxu0 0.0
    %229 = vmatpush.msra.mxu0 0.0
    %230 = vmatpush.msra.mxu0 0.0
    %231 = vmatpush.msra.mxu0 0.0
    %232 = vmatpush.msra.mxu0 %v172
    %233 = vmatpush.msra.mxu0 %v171
    %234 = vmatpush.msra.mxu0 %v170
    %235 = vmatpush.msra.mxu0 %v169
    %236 = vmatpush.msra.mxu0 %v168
    %237 = vmatpush.msra.mxu0 %v167
    %238 = vmatpush.msra.mxu0 %v166
    %239 = vmatpush.msra.mxu0 %v165
    %240 = vmatmul.f32.gmra.mxu0 %v210
    %v241 = vpop.f32.mrf.mxu0
    %v242 = vadd.f32 %v186, %v241
    %243 = vmatmul.f32.gmra.mxu0 %v213
    %v244 = vpop.f32.mrf.mxu0
    %v245 = vadd.f32 %v191, %v244
    %246 = vmatmul.f32.gmra.mxu0 %v216
    %v247 = vpop.f32.mrf.mxu0
    %v248 = vadd.f32 %v196, %v247
    %249 = vmatmul.f32.gmra.mxu0 %v219
    %v250 = vpop.f32.mrf.mxu0
    %v251 = vadd.f32 %v201, %v250
    %252 = vmatmul.f32.gmra.mxu0 %v222
    %v253 = vpop.f32.mrf.mxu0
    %v254 = vadd.f32 %v206, %v253
    %255 = vdwg.mxu0
    %v256 = vtanh.pop %v242
    %v257 = vtanh.pop %v245
    %v258 = vtanh.pop %v248
    %v259 = vtanh.pop %v251
    %v260 = vtanh.pop %v254
    %v261 = vld [vmem:[%s5] sm:$0xff]
    %v262 = vld [vmem:[%s5 + $0x8] sm:$0xff]
    %v263 = vld [vmem:[%s5 + $0x10] sm:$0xf]
    %v264 = vld [vmem:[%s6] sm:$0xff]
    %v265 = vld [vmem:[%s6 + $0x8] sm:$0xff]
    %v266 = vld [vmem:[%s6 + $0x10] sm:$0xf]
    %268 = vset.pattern.permute.xlu0 0
    %269 = vperm.xlu0 %268, %v264
    %v270 = vpop.permute.xlu0 %269
    %273 = vset.pattern.permute.xlu0 0
    %274 = vperm.xlu0 %273, %v265
    %v275 = vpop.permute.xlu0 %274
    %278 = vset.pattern.permute.xlu0 0
    %279 = vperm.xlu0 %278, %v266
    %v280 = vpop.permute.xlu0 %279
    %vm282 = vcmask 326656
    %v284 = vsel %vm282, %v261, 0
    %v287 = vsel %vm282, %v262, 0
    %v290 = vsel %vm282, %v263, 0
    %292 = vmatpush.msra.mxu0 0.0
    %293 = vmatpush.msra.mxu0 0.0
    %294 = vmatpush.msra.mxu0 0.0
    %295 = vmatpush.msra.mxu0 0.0
    %296 = vmatpush.msra.mxu0 0.0
    %297 = vmatpush.msra.mxu0 0.0
    %298 = vmatpush.msra.mxu0 0.0
    %299 = vmatpush.msra.mxu0 0.0
    %300 = vmatpush.msra.mxu0 0.0
    %301 = vmatpush.msra.mxu0 0.0
    %302 = vmatpush.msra.mxu0 0.0
    %303 = vmatpush.msra.mxu0 %v260
    %304 = vmatpush.msra.mxu0 %v259
    %305 = vmatpush.msra.mxu0 %v258
    %306 = vmatpush.msra.mxu0 %v257
    %307 = vmatpush.msra.mxu0 %v256
    %308 = vmatmul.f32.gmra.mxu0 %v284
    %v309 = vpop.f32.mrf.mxu0
    %v310 = vadd.f32 %v270, %v309
    %311 = vmatmul.f32.gmra.mxu0 %v287
    %v312 = vpop.f32.mrf.mxu0
    %v313 = vadd.f32 %v275, %v312
    %314 = vmatmul.f32.gmra.mxu0 %v290
    %v315 = vpop.f32.mrf.mxu0
    %v316 = vadd.f32 %v280, %v315
    %317 = vdwg.mxu0
    %v318 = vtanh.pop %v310
    %v319 = vtanh.pop %v313
    %v320 = vtanh.pop %v316
    %v321 = vld [vmem:[%s7] sm:$0xff]
    %v322 = vld [vmem:[%s7 + $0x8] sm:$0x3f]
    %v323 = vld [vmem:[%s8] sm:$0xff]
    %v324 = vld [vmem:[%s8 + $0x8] sm:$0x3f]
    %326 = vset.pattern.permute.xlu0 0
    %327 = vperm.xlu0 %326, %v323
    %v328 = vpop.permute.xlu0 %327
    %331 = vset.pattern.permute.xlu0 0
    %332 = vperm.xlu0 %331, %v324
    %v333 = vpop.permute.xlu0 %332
    %vm335 = vcmask 162816
    %v337 = vsel %vm335, %v321, 0
    %v340 = vsel %vm335, %v322, 0
    %vm342 = vcmask 1043456
    %v344 = vsel %vm342, %v320, 0
    %346 = vmatpush.msra.mxu0 0.0
    %347 = vmatpush.msra.mxu0 0.0
    %348 = vmatpush.msra.mxu0 0.0
    %349 = vmatpush.msra.mxu0 0.0
    %350 = vmatpush.msra.mxu0 0.0
    %351 = vmatpush.msra.mxu0 0.0
    %352 = vmatpush.msra.mxu0 0.0
    %353 = vmatpush.msra.mxu0 0.0
    %354 = vmatpush.msra.mxu0 0.0
    %355 = vmatpush.msra.mxu0 0.0
    %356 = vmatpush.msra.mxu0 0.0
    %357 = vmatpush.msra.mxu0 0.0
    %358 = vmatpush.msra.mxu0 0.0
    %359 = vmatpush.msra.mxu0 %v344
    %360 = vmatpush.msra.mxu0 %v319
    %361 = vmatpush.msra.mxu0 %v318
    %362 = vmatmul.f32.gmra.mxu0 %v337
    %v363 = vpop.f32.mrf.mxu0
    %v364 = vadd.f32 %v328, %v363
    %365 = vmatmul.f32.gmra.mxu0 %v340
    %v366 = vpop.f32.mrf.mxu0
    %v367 = vadd.f32 %v333, %v366
    %368 = vdwg.mxu0
    %v369 = vtanh.pop %v364
    %v370 = vtanh.pop %v367
    %v371 = vld [vmem:[%s9] sm:$0x3]
    %v372 = vld [vmem:[%s10] sm:$0x3]
    %374 = vset.pattern.permute.xlu0 0
    %375 = vperm.xlu0 %374, %v372
    %v376 = vpop.permute.xlu0 %375
    %vm378 = vcmask 113664
    %v380 = vsel %vm378, %v371, 0
    %vm382 = vcmask 1045504
    %v384 = vsel %vm382, %v370, 0
    %386 = vmatpush.msra.mxu0 0.0
    %387 = vmatpush.msra.mxu0 0.0
    %388 = vmatpush.msra.mxu0 0.0
    %389 = vmatpush.msra.mxu0 0.0
    %390 = vmatpush.msra.mxu0 0.0
    %391 = vmatpush.msra.mxu0 0.0
    %392 = vmatpush.msra.mxu0 0.0
    %393 = vmatpush.msra.mxu0 0.0
    %394 = vmatpush.msra.mxu0 0.0
    %395 = vmatpush.msra.mxu0 0.0
    %396 = vmatpush.msra.mxu0 0.0
    %397 = vmatpush.msra.mxu0 0.0
    %398 = vmatpush.msra.mxu0 0.0
    %399 = vmatpush.msra.mxu0 0.0
    %400 = vmatpush.msra.mxu0 %v384
    %401 = vmatpush.msra.mxu0 %v369
    %402 = vmatmul.f32.gmra.mxu0 %v380
    %v403 = vpop.f32.mrf.mxu0
    %v404 = vadd.f32 %v376, %v403
    %405 = vdwg.mxu0
    %vm406 = vcmask 58368
    %407 = vst.msk [vmem:[#allocation2] sm:$0x3] %vm406, %v404
    // Predicated region
    $region46: #{_mlp_forward_impl.1} parent=1 // pred_check
      _
    $region47: #{_mlp_forward_impl.1} parent=1 // pred_check_branch
      %409 = sbr.rel (0) target = $region49
    $region48: #{_mlp_forward_impl.1} parent=1 // pred_region
      %411 = vsyncadd [#allocation3], 0
      %s413 = sshll.u32 [#allocation2], 4
      %s414 = int_to_ptr.vmem [resolvable:$true] %s413
      %s415 = sshll.u32 %s11, 4
      %s416 = int_to_ptr.hbm [resolvable:$true] %s415
      %418 = dma.vmem_to_hbm [thread:$0]  %s414, 32, %s416, [#allocation3]
    $region49: #{_mlp_forward_impl.1} parent=1 // pred_fallthru
      _
    // Predicated region
    $region50: #{_mlp_forward_impl.1} parent=1 // pred_check
      _
    $region51: #{_mlp_forward_impl.1} parent=1 // pred_check_branch
      %420 = sbr.rel (0) target = $region53
    $region52: #{_mlp_forward_impl.1} parent=1 // pred_region
      %422 = dma.done [#allocation3], 32
    $region53: #{_mlp_forward_impl.1} parent=1 // pred_fallthru
      _
    %423 = vsyncpa [#allocation3], 1

</llo_original>
